<compile_context>
chip_gen: v5e
topology: v5e:2x2
jax: 0.10.0
libtpu: 0.0.40
codegen_flags: <defaults>
</compile_context>

<pallas_src>
import math

import jax
import jax.numpy as jnp
from jax.experimental import pallas as pl
from jax.experimental.pallas import tpu as pltpu

# ---- model hyperparameters (match the PyTorch module) ----------------------
LATENT = 30
HIDDEN4 = 16
HIDDEN3 = 16
HIDDEN2 = 32
HIDDEN1 = 32
OUTPUT_SIZE = 70
BN_EPS = 1e-5

PAD = 128  # uniform lane width for all activations / weight tiles

# Forward-order layer dims: (d_in, d_out)
LAYER_DIMS = [
    (LATENT, HIDDEN4),    # latent_to_hidden4
    (HIDDEN4, HIDDEN3),   # hidden4_to_hidden3
    (HIDDEN3, HIDDEN2),   # hidden3_to_hidden2
    (HIDDEN2, HIDDEN1),   # hidden2_to_hidden1
    (HIDDEN1, OUTPUT_SIZE)  # hidden1_to_output
]
BN_DIMS = [HIDDEN4, HIDDEN3, HIDDEN2, HIDDEN1]  # Batch4, Batch3, Batch2, Batch1

# v_slab row layout: 0..4 biases b1..b5, 5..8 BN gammas, 9..12 BN betas (13 rows -> pad 16)
V_ROWS = 16


# ---------------------------------------------------------------------------
# Kernel: whole decoder, single VMEM-resident block (grid = ()).
# ---------------------------------------------------------------------------
def decoder_kernel(x_ref, w_ref, v_ref, out_ref):
    h = x_ref[...]  # (B, 128) f32; latent zero-padded to 128 lanes

    # 4 x (Linear -> BatchNorm -> ReLU), fully unrolled (static trip count).
    for layer in range(4):
        w = w_ref[layer]                       # (128, 128) bf16 (zero-padded)
        b = v_ref[layer:layer + 1, :]          # (1, 128) f32, implicit broadcast
        h = jnp.dot(h.astype(jnp.bfloat16), w,
                    preferred_element_type=jnp.float32) + b

        # BatchNorm1d, training-mode stats, folded into one scale/shift FMA.
        mu = jnp.mean(h, axis=0, keepdims=True)            # (1, 128)
        msq = jnp.mean(h * h, axis=0, keepdims=True)        # (1, 128)
        var = msq - mu * mu                                  # biased variance
        gamma = v_ref[5 + layer:6 + layer, :]                # (1, 128)
        beta = v_ref[9 + layer:10 + layer, :]                # (1, 128)
        scale = gamma * jax.lax.rsqrt(var + BN_EPS)
        shift = beta - mu * scale
        h = jnp.maximum(h * scale + shift, 0.0)              # BN + ReLU

    # Final linear head (no BN / activation).
    w = w_ref[4]
    b = v_ref[4:5, :]
    out = jnp.dot(h.astype(jnp.bfloat16), w,
                  preferred_element_type=jnp.float32) + b
    out_ref[...] = out.astype(out_ref.dtype)                 # lane-dense (B, 128) store


# ---------------------------------------------------------------------------
# Parameter construction: synthetic weights packed into two contiguous slabs.
# ---------------------------------------------------------------------------
def make_param_slabs(key):
    """Returns (w_slab bf16 (5,128,128), v_slab f32 (16,128))."""
    keys = jax.random.split(key, len(LAYER_DIMS))
    w_slab = jnp.zeros((len(LAYER_DIMS), PAD, PAD), jnp.bfloat16)
    v_slab = jnp.zeros((V_ROWS, PAD), jnp.float32)

    for i, ((d_in, d_out), k) in enumerate(zip(LAYER_DIMS, keys)):
        kw, kb = jax.random.split(k)
        bound = 1.0 / math.sqrt(d_in)                         # PyTorch nn.Linear default
        w = jax.random.uniform(kw, (d_in, d_out), jnp.float32, -bound, bound)
        b = jax.random.uniform(kb, (d_out,), jnp.float32, -bound, bound)
        w_slab = w_slab.at[i, :d_in, :d_out].set(w.astype(jnp.bfloat16))
        v_slab = v_slab.at[i, :d_out].set(b)

    # BatchNorm affine: gamma = 1, beta = 0 (PyTorch init); padded lanes stay 0.
    for i, d in enumerate(BN_DIMS):
        v_slab = v_slab.at[5 + i, :d].set(1.0)

    return w_slab, v_slab


# ---------------------------------------------------------------------------
# Wrapper: one pallas_call, everything in VMEM, no grid.
# ---------------------------------------------------------------------------
@jax.jit
def decoder_forward(latent, w_slab, v_slab):
    batch = latent.shape[0]

    # Zero-pad the latent to a lane-dense (B, 128) slab (done once in XLA).
    x = jnp.zeros((batch, PAD), jnp.float32).at[:, :LATENT].set(
        latent.astype(jnp.float32))

    flops = 2 * batch * sum(d_in * d_out for d_in, d_out in LAYER_DIMS)
    bytes_accessed = (x.size * 4 + w_slab.size * 2 + v_slab.size * 4
                      + batch * PAD * 4)
    cost = pl.CostEstimate(flops=flops,
                           transcendentals=4 * PAD,   # 4 rsqrt rows of 128 lanes
                           bytes_accessed=bytes_accessed)

    vmem = pl.BlockSpec(memory_space=pltpu.MemorySpace.VMEM)
    out_padded = pl.pallas_call(
        decoder_kernel,
        out_shape=jax.ShapeDtypeStruct((batch, PAD), jnp.float32),
        in_specs=[vmem, vmem, vmem],
        out_specs=vmem,
        cost_estimate=cost,
    )(x, w_slab, v_slab)

    return out_padded[:, :OUTPUT_SIZE]


if __name__ == "__main__":
    key = jax.random.PRNGKey(0)
    k_latent, k_params = jax.random.split(key)

    batch = 8  # small demo batch; kernel supports any batch in one block
    latent = jax.random.normal(k_latent, (batch, LATENT), jnp.float32)
    w_slab, v_slab = make_param_slabs(k_params)

    out = decoder_forward(latent, w_slab, v_slab)
    jax.block_until_ready(out)

    assert out.shape == (batch, OUTPUT_SIZE)
    assert bool(jnp.all(jnp.isfinite(out)))
    print("KERNEL_OK")
</pallas_src>

<mosaic_0001>
module attributes {stable_mosaic.version = 11 : i64} {
  func.func @decoder_kernel(%arg0: memref<8x128xf32, #tpu.memory_space<vmem>>, %arg1: memref<5x128x128xbf16, #tpu.memory_space<vmem>>, %arg2: memref<16x128xf32, #tpu.memory_space<vmem>>, %arg3: memref<8x128xf32, #tpu.memory_space<vmem>>) attributes {dimension_semantics = [], scalar_prefetch = 0 : i64, scratch_operands = 0 : i64, tpu.core_type = #tpu.core_type<tc>} {
    %c0 = arith.constant 0 : index
    %c0_0 = arith.constant 0 : index
    %0 = vector.load %arg0[%c0, %c0_0] : memref<8x128xf32, #tpu.memory_space<vmem>>, vector<8x128xf32>
    %c0_1 = arith.constant 0 : index
    %c0_2 = arith.constant 0 : index
    %c0_3 = arith.constant 0 : index
    %1 = vector.load %arg1[%c0_1, %c0_2, %c0_3] : memref<5x128x128xbf16, #tpu.memory_space<vmem>>, vector<1x128x128xbf16>
    %2 = vector.shape_cast %1 : vector<1x128x128xbf16> to vector<128x128xbf16>
    %c0_4 = arith.constant 0 : index
    %c0_5 = arith.constant 0 : index
    %3 = vector.load %arg2[%c0_4, %c0_5] : memref<16x128xf32, #tpu.memory_space<vmem>>, vector<1x128xf32>
    %4 = arith.truncf %0 : vector<8x128xf32> to vector<8x128xbf16>
    %cst = arith.constant dense<0.000000e+00> : vector<8x128xf32>
    %5 = tpu.matmul %4, %2, %cst {dimension_numbers = #tpu.dot_dimension_numbers<[1], [0], [0], [1], [0, 0, 1, 1], [], []>} : vector<8x128xbf16>, vector<128x128xbf16>, vector<8x128xf32> -> vector<8x128xf32>
    %6 = vector.broadcast %3 : vector<1x128xf32> to vector<8x128xf32>
    %7 = arith.addf %5, %6 : vector<8x128xf32>
    %cst_6 = arith.constant dense<0.000000e+00> : vector<128xf32>
    %8 = vector.multi_reduction <add>, %7, %cst_6 [0] : vector<8x128xf32> to vector<128xf32>
    %9 = vector.shape_cast %8 : vector<128xf32> to vector<1x128xf32>
    %cst_7 = arith.constant 8.000000e+00 : f32
    %10 = vector.broadcast %cst_7 : f32 to vector<1x128xf32>
    %11 = arith.divf %9, %10 : vector<1x128xf32>
    %12 = arith.mulf %7, %7 : vector<8x128xf32>
    %cst_8 = arith.constant dense<0.000000e+00> : vector<128xf32>
    %13 = vector.multi_reduction <add>, %12, %cst_8 [0] : vector<8x128xf32> to vector<128xf32>
    %14 = vector.shape_cast %13 : vector<128xf32> to vector<1x128xf32>
    %cst_9 = arith.constant 8.000000e+00 : f32
    %15 = vector.broadcast %cst_9 : f32 to vector<1x128xf32>
    %16 = arith.divf %14, %15 : vector<1x128xf32>
    %17 = arith.mulf %11, %11 : vector<1x128xf32>
    %18 = arith.subf %16, %17 : vector<1x128xf32>
    %c5 = arith.constant 5 : index
    %c0_10 = arith.constant 0 : index
    %19 = vector.load %arg2[%c5, %c0_10] : memref<16x128xf32, #tpu.memory_space<vmem>>, vector<1x128xf32>
    %c9 = arith.constant 9 : index
    %c0_11 = arith.constant 0 : index
    %20 = vector.load %arg2[%c9, %c0_11] : memref<16x128xf32, #tpu.memory_space<vmem>>, vector<1x128xf32>
    %cst_12 = arith.constant 9.99999974E-6 : f32
    %21 = vector.broadcast %cst_12 : f32 to vector<1x128xf32>
    %22 = arith.addf %18, %21 : vector<1x128xf32>
    %23 = math.rsqrt %22 : vector<1x128xf32>
    %24 = arith.mulf %19, %23 : vector<1x128xf32>
    %25 = arith.mulf %11, %24 : vector<1x128xf32>
    %26 = arith.subf %20, %25 : vector<1x128xf32>
    %27 = vector.broadcast %24 : vector<1x128xf32> to vector<8x128xf32>
    %28 = arith.mulf %7, %27 : vector<8x128xf32>
    %29 = vector.broadcast %26 : vector<1x128xf32> to vector<8x128xf32>
    %30 = arith.addf %28, %29 : vector<8x128xf32>
    %cst_13 = arith.constant 0.000000e+00 : f32
    %31 = vector.broadcast %cst_13 : f32 to vector<8x128xf32>
    %32 = arith.maximumf %30, %31 : vector<8x128xf32>
    %c1 = arith.constant 1 : index
    %c0_14 = arith.constant 0 : index
    %c0_15 = arith.constant 0 : index
    %33 = vector.load %arg1[%c1, %c0_14, %c0_15] : memref<5x128x128xbf16, #tpu.memory_space<vmem>>, vector<1x128x128xbf16>
    %34 = vector.shape_cast %33 : vector<1x128x128xbf16> to vector<128x128xbf16>
    %c1_16 = arith.constant 1 : index
    %c0_17 = arith.constant 0 : index
    %35 = vector.load %arg2[%c1_16, %c0_17] : memref<16x128xf32, #tpu.memory_space<vmem>>, vector<1x128xf32>
    %36 = arith.truncf %32 : vector<8x128xf32> to vector<8x128xbf16>
    %cst_18 = arith.constant dense<0.000000e+00> : vector<8x128xf32>
    %37 = tpu.matmul %36, %34, %cst_18 {dimension_numbers = #tpu.dot_dimension_numbers<[1], [0], [0], [1], [0, 0, 1, 1], [], []>} : vector<8x128xbf16>, vector<128x128xbf16>, vector<8x128xf32> -> vector<8x128xf32>
    %38 = vector.broadcast %35 : vector<1x128xf32> to vector<8x128xf32>
    %39 = arith.addf %37, %38 : vector<8x128xf32>
    %cst_19 = arith.constant dense<0.000000e+00> : vector<128xf32>
    %40 = vector.multi_reduction <add>, %39, %cst_19 [0] : vector<8x128xf32> to vector<128xf32>
    %41 = vector.shape_cast %40 : vector<128xf32> to vector<1x128xf32>
    %cst_20 = arith.constant 8.000000e+00 : f32
    %42 = vector.broadcast %cst_20 : f32 to vector<1x128xf32>
    %43 = arith.divf %41, %42 : vector<1x128xf32>
    %44 = arith.mulf %39, %39 : vector<8x128xf32>
    %cst_21 = arith.constant dense<0.000000e+00> : vector<128xf32>
    %45 = vector.multi_reduction <add>, %44, %cst_21 [0] : vector<8x128xf32> to vector<128xf32>
    %46 = vector.shape_cast %45 : vector<128xf32> to vector<1x128xf32>
    %cst_22 = arith.constant 8.000000e+00 : f32
    %47 = vector.broadcast %cst_22 : f32 to vector<1x128xf32>
    %48 = arith.divf %46, %47 : vector<1x128xf32>
    %49 = arith.mulf %43, %43 : vector<1x128xf32>
    %50 = arith.subf %48, %49 : vector<1x128xf32>
    %c6 = arith.constant 6 : index
    %c0_23 = arith.constant 0 : index
    %51 = vector.load %arg2[%c6, %c0_23] : memref<16x128xf32, #tpu.memory_space<vmem>>, vector<1x128xf32>
    %c10 = arith.constant 10 : index
    %c0_24 = arith.constant 0 : index
    %52 = vector.load %arg2[%c10, %c0_24] : memref<16x128xf32, #tpu.memory_space<vmem>>, vector<1x128xf32>
    %cst_25 = arith.constant 9.99999974E-6 : f32
    %53 = vector.broadcast %cst_25 : f32 to vector<1x128xf32>
    %54 = arith.addf %50, %53 : vector<1x128xf32>
    %55 = math.rsqrt %54 : vector<1x128xf32>
    %56 = arith.mulf %51, %55 : vector<1x128xf32>
    %57 = arith.mulf %43, %56 : vector<1x128xf32>
    %58 = arith.subf %52, %57 : vector<1x128xf32>
    %59 = vector.broadcast %56 : vector<1x128xf32> to vector<8x128xf32>
    %60 = arith.mulf %39, %59 : vector<8x128xf32>
    %61 = vector.broadcast %58 : vector<1x128xf32> to vector<8x128xf32>
    %62 = arith.addf %60, %61 : vector<8x128xf32>
    %cst_26 = arith.constant 0.000000e+00 : f32
    %63 = vector.broadcast %cst_26 : f32 to vector<8x128xf32>
    %64 = arith.maximumf %62, %63 : vector<8x128xf32>
    %c2 = arith.constant 2 : index
    %c0_27 = arith.constant 0 : index
    %c0_28 = arith.constant 0 : index
    %65 = vector.load %arg1[%c2, %c0_27, %c0_28] : memref<5x128x128xbf16, #tpu.memory_space<vmem>>, vector<1x128x128xbf16>
    %66 = vector.shape_cast %65 : vector<1x128x128xbf16> to vector<128x128xbf16>
    %c2_29 = arith.constant 2 : index
    %c0_30 = arith.constant 0 : index
    %67 = vector.load %arg2[%c2_29, %c0_30] : memref<16x128xf32, #tpu.memory_space<vmem>>, vector<1x128xf32>
    %68 = arith.truncf %64 : vector<8x128xf32> to vector<8x128xbf16>
    %cst_31 = arith.constant dense<0.000000e+00> : vector<8x128xf32>
    %69 = tpu.matmul %68, %66, %cst_31 {dimension_numbers = #tpu.dot_dimension_numbers<[1], [0], [0], [1], [0, 0, 1, 1], [], []>} : vector<8x128xbf16>, vector<128x128xbf16>, vector<8x128xf32> -> vector<8x128xf32>
    %70 = vector.broadcast %67 : vector<1x128xf32> to vector<8x128xf32>
    %71 = arith.addf %69, %70 : vector<8x128xf32>
    %cst_32 = arith.constant dense<0.000000e+00> : vector<128xf32>
    %72 = vector.multi_reduction <add>, %71, %cst_32 [0] : vector<8x128xf32> to vector<128xf32>
    %73 = vector.shape_cast %72 : vector<128xf32> to vector<1x128xf32>
    %cst_33 = arith.constant 8.000000e+00 : f32
    %74 = vector.broadcast %cst_33 : f32 to vector<1x128xf32>
    %75 = arith.divf %73, %74 : vector<1x128xf32>
    %76 = arith.mulf %71, %71 : vector<8x128xf32>
    %cst_34 = arith.constant dense<0.000000e+00> : vector<128xf32>
    %77 = vector.multi_reduction <add>, %76, %cst_34 [0] : vector<8x128xf32> to vector<128xf32>
    %78 = vector.shape_cast %77 : vector<128xf32> to vector<1x128xf32>
    %cst_35 = arith.constant 8.000000e+00 : f32
    %79 = vector.broadcast %cst_35 : f32 to vector<1x128xf32>
    %80 = arith.divf %78, %79 : vector<1x128xf32>
    %81 = arith.mulf %75, %75 : vector<1x128xf32>
    %82 = arith.subf %80, %81 : vector<1x128xf32>
    %c7 = arith.constant 7 : index
    %c0_36 = arith.constant 0 : index
    %83 = vector.load %arg2[%c7, %c0_36] : memref<16x128xf32, #tpu.memory_space<vmem>>, vector<1x128xf32>
    %c11 = arith.constant 11 : index
    %c0_37 = arith.constant 0 : index
    %84 = vector.load %arg2[%c11, %c0_37] : memref<16x128xf32, #tpu.memory_space<vmem>>, vector<1x128xf32>
    %cst_38 = arith.constant 9.99999974E-6 : f32
    %85 = vector.broadcast %cst_38 : f32 to vector<1x128xf32>
    %86 = arith.addf %82, %85 : vector<1x128xf32>
    %87 = math.rsqrt %86 : vector<1x128xf32>
    %88 = arith.mulf %83, %87 : vector<1x128xf32>
    %89 = arith.mulf %75, %88 : vector<1x128xf32>
    %90 = arith.subf %84, %89 : vector<1x128xf32>
    %91 = vector.broadcast %88 : vector<1x128xf32> to vector<8x128xf32>
    %92 = arith.mulf %71, %91 : vector<8x128xf32>
    %93 = vector.broadcast %90 : vector<1x128xf32> to vector<8x128xf32>
    %94 = arith.addf %92, %93 : vector<8x128xf32>
    %cst_39 = arith.constant 0.000000e+00 : f32
    %95 = vector.broadcast %cst_39 : f32 to vector<8x128xf32>
    %96 = arith.maximumf %94, %95 : vector<8x128xf32>
    %c3 = arith.constant 3 : index
    %c0_40 = arith.constant 0 : index
    %c0_41 = arith.constant 0 : index
    %97 = vector.load %arg1[%c3, %c0_40, %c0_41] : memref<5x128x128xbf16, #tpu.memory_space<vmem>>, vector<1x128x128xbf16>
    %98 = vector.shape_cast %97 : vector<1x128x128xbf16> to vector<128x128xbf16>
    %c3_42 = arith.constant 3 : index
    %c0_43 = arith.constant 0 : index
    %99 = vector.load %arg2[%c3_42, %c0_43] : memref<16x128xf32, #tpu.memory_space<vmem>>, vector<1x128xf32>
    %100 = arith.truncf %96 : vector<8x128xf32> to vector<8x128xbf16>
    %cst_44 = arith.constant dense<0.000000e+00> : vector<8x128xf32>
    %101 = tpu.matmul %100, %98, %cst_44 {dimension_numbers = #tpu.dot_dimension_numbers<[1], [0], [0], [1], [0, 0, 1, 1], [], []>} : vector<8x128xbf16>, vector<128x128xbf16>, vector<8x128xf32> -> vector<8x128xf32>
    %102 = vector.broadcast %99 : vector<1x128xf32> to vector<8x128xf32>
    %103 = arith.addf %101, %102 : vector<8x128xf32>
    %cst_45 = arith.constant dense<0.000000e+00> : vector<128xf32>
    %104 = vector.multi_reduction <add>, %103, %cst_45 [0] : vector<8x128xf32> to vector<128xf32>
    %105 = vector.shape_cast %104 : vector<128xf32> to vector<1x128xf32>
    %cst_46 = arith.constant 8.000000e+00 : f32
    %106 = vector.broadcast %cst_46 : f32 to vector<1x128xf32>
    %107 = arith.divf %105, %106 : vector<1x128xf32>
    %108 = arith.mulf %103, %103 : vector<8x128xf32>
    %cst_47 = arith.constant dense<0.000000e+00> : vector<128xf32>
    %109 = vector.multi_reduction <add>, %108, %cst_47 [0] : vector<8x128xf32> to vector<128xf32>
    %110 = vector.shape_cast %109 : vector<128xf32> to vector<1x128xf32>
    %cst_48 = arith.constant 8.000000e+00 : f32
    %111 = vector.broadcast %cst_48 : f32 to vector<1x128xf32>
    %112 = arith.divf %110, %111 : vector<1x128xf32>
    %113 = arith.mulf %107, %107 : vector<1x128xf32>
    %114 = arith.subf %112, %113 : vector<1x128xf32>
    %c8 = arith.constant 8 : index
    %c0_49 = arith.constant 0 : index
    %115 = vector.load %arg2[%c8, %c0_49] : memref<16x128xf32, #tpu.memory_space<vmem>>, vector<1x128xf32>
    %c12 = arith.constant 12 : index
    %c0_50 = arith.constant 0 : index
    %116 = vector.load %arg2[%c12, %c0_50] : memref<16x128xf32, #tpu.memory_space<vmem>>, vector<1x128xf32>
    %cst_51 = arith.constant 9.99999974E-6 : f32
    %117 = vector.broadcast %cst_51 : f32 to vector<1x128xf32>
    %118 = arith.addf %114, %117 : vector<1x128xf32>
    %119 = math.rsqrt %118 : vector<1x128xf32>
    %120 = arith.mulf %115, %119 : vector<1x128xf32>
    %121 = arith.mulf %107, %120 : vector<1x128xf32>
    %122 = arith.subf %116, %121 : vector<1x128xf32>
    %123 = vector.broadcast %120 : vector<1x128xf32> to vector<8x128xf32>
    %124 = arith.mulf %103, %123 : vector<8x128xf32>
    %125 = vector.broadcast %122 : vector<1x128xf32> to vector<8x128xf32>
    %126 = arith.addf %124, %125 : vector<8x128xf32>
    %cst_52 = arith.constant 0.000000e+00 : f32
    %127 = vector.broadcast %cst_52 : f32 to vector<8x128xf32>
    %128 = arith.maximumf %126, %127 : vector<8x128xf32>
    %c4 = arith.constant 4 : index
    %c0_53 = arith.constant 0 : index
    %c0_54 = arith.constant 0 : index
    %129 = vector.load %arg1[%c4, %c0_53, %c0_54] : memref<5x128x128xbf16, #tpu.memory_space<vmem>>, vector<1x128x128xbf16>
    %130 = vector.shape_cast %129 : vector<1x128x128xbf16> to vector<128x128xbf16>
    %c4_55 = arith.constant 4 : index
    %c0_56 = arith.constant 0 : index
    %131 = vector.load %arg2[%c4_55, %c0_56] : memref<16x128xf32, #tpu.memory_space<vmem>>, vector<1x128xf32>
    %132 = arith.truncf %128 : vector<8x128xf32> to vector<8x128xbf16>
    %cst_57 = arith.constant dense<0.000000e+00> : vector<8x128xf32>
    %133 = tpu.matmul %132, %130, %cst_57 {dimension_numbers = #tpu.dot_dimension_numbers<[1], [0], [0], [1], [0, 0, 1, 1], [], []>} : vector<8x128xbf16>, vector<128x128xbf16>, vector<8x128xf32> -> vector<8x128xf32>
    %134 = vector.broadcast %131 : vector<1x128xf32> to vector<8x128xf32>
    %135 = arith.addf %133, %134 : vector<8x128xf32>
    %c0_58 = arith.constant 0 : index
    %c0_59 = arith.constant 0 : index
    %136 = vector.load %arg3[%c0_58, %c0_59] : memref<8x128xf32, #tpu.memory_space<vmem>>, vector<8x128xf32>
    tpu.vector_store %arg3[%c0_58, %c0_59], %135 {strides = array<i32>} : memref<8x128xf32, #tpu.memory_space<vmem>>, vector<8x128xf32>,
    return
  }
}

</mosaic_0001>

<llo_original>
// kernel: decoder_forward.1
$region0: #{decoder_forward.1}
  #allocation0 [shape = 'u32[]', space=smem, size = 0x4, offset = 0x4, fixed_abs, tag = 'smem constant byte address 0x4 - core index']
  #allocation1 [shape = 'u32[72,128]{1,0:T(1,128)}', space=vmem, size = 0x9000, scoped, tag = 'internal scratch']
  %s0 = inlined_call_operand.vmem [shape: f32[8,128], index: 0, kind: input, shape index: {}]
  %s1 = inlined_call_operand.hbm [shape: bf16[5,128,128], index: 1, kind: input, shape index: {}]
  %s2 = inlined_call_operand.vmem [shape: f32[16,128], index: 2, kind: input, shape index: {}]
  %s3 = inlined_call_operand.hbm [shape: f32[8,128], index: 3, kind: output, shape index: {}]
  %s4 = sld [smem:[#allocation0]]
  $region26: #{decoder_forward.1} parent=0
    _
  %s6 = ssub.s32 1, %s4
  %s7 = scalar_select 0, %s6, %s4
  $region1: #{decoder_forward.1} parent=0
    #allocation2 [shape = 'u8[163840]{0}', space=vmem, size = 0x28000, scoped, tag = 'input window, operand 1, single buffered']
    #allocation3 [shape = 's32[1]{0}', space=sflag, size = 0x4, scoped, tag = 'scoped memory for decoder_forward.1']
    #allocation4 [shape = 's32[1]{0}', space=sflag, size = 0x4, scoped, tag = 'scoped memory for decoder_forward.1']
    #allocation5 [shape = 'u8[4096]{0}', space=vmem, size = 0x1000, scoped, tag = 'output window, operand 0, single buffered']
    %8 = vsyncpa [#allocation3], 0
    %9 = vsyncpa [#allocation4], 0
    // Predicated region
    $region2: #{decoder_forward.1} parent=1 // pred_check
      _
    $region3: #{decoder_forward.1} parent=1 // pred_check_branch
      %11 = sbr.rel (0) target = $region5
    $region4: #{decoder_forward.1} parent=1 // pred_region
      _
    $region5: #{decoder_forward.1} parent=1 // pred_fallthru
      _
    // Predicated region
    $region6: #{decoder_forward.1} parent=1 // pred_check
      _
    $region7: #{decoder_forward.1} parent=1 // pred_check_branch
      %13 = sbr.rel (0) target = $region9
    $region8: #{decoder_forward.1} parent=1 // pred_region
      %15 = vsyncadd [#allocation3], 0
      %s16 = sshll.u32 %s1, 4
      %s17 = int_to_ptr.hbm [resolvable:$true] %s16
      %s18 = sshll.u32 [#allocation2], 4
      %s19 = int_to_ptr.vmem [resolvable:$true] %s18
      %24 = dma.hbm_to_vmem [thread:$0]  %s17, 5120, %s19, [#allocation3], 64, 64, 4
    $region9: #{decoder_forward.1} parent=1 // pred_fallthru
      _
    // Predicated region
    $region10: #{decoder_forward.1} parent=1 // pred_check
      _
    $region11: #{decoder_forward.1} parent=1 // pred_check_branch
      %26 = sbr.rel (0) target = $region13
    $region12: #{decoder_forward.1} parent=1 // pred_region
      _
    $region13: #{decoder_forward.1} parent=1 // pred_fallthru
      _
    // Predicated region
    $region14: #{decoder_forward.1} parent=1 // pred_check
      _
    $region15: #{decoder_forward.1} parent=1 // pred_check_branch
      %28 = sbr.rel (0) target = $region17
    $region16: #{decoder_forward.1} parent=1 // pred_region
      %30 = dma.done [#allocation3], 5120
    $region17: #{decoder_forward.1} parent=1 // pred_fallthru
      _
    %v31 = vld [vmem:[%s0] sm:$0xff]
    %v32 = vld [vmem:[#allocation2] sm:$0xf]
    %v33 = vld [vmem:[#allocation2 + $0x4] sm:$0xf]
    %v34 = vld [vmem:[#allocation2 + $0x8] sm:$0xf]
    %v35 = vld [vmem:[#allocation2 + $0xc] sm:$0xf]
    %v36 = vld [vmem:[#allocation2 + $0x10] sm:$0xf]
    %v37 = vld [vmem:[#allocation2 + $0x14] sm:$0xf]
    %v38 = vld [vmem:[#allocation2 + $0x18] sm:$0xf]
    %v39 = vld [vmem:[#allocation2 + $0x1c] sm:$0xf]
    %v40 = vld [vmem:[#allocation2 + $0x20] sm:$0xf]
    %v41 = vld [vmem:[#allocation2 + $0x24] sm:$0xf]
    %v42 = vld [vmem:[#allocation2 + $0x28] sm:$0xf]
    %v43 = vld [vmem:[#allocation2 + $0x2c] sm:$0xf]
    %v44 = vld [vmem:[#allocation2 + $0x30] sm:$0xf]
    %v45 = vld [vmem:[#allocation2 + $0x34] sm:$0xf]
    %v46 = vld [vmem:[#allocation2 + $0x38] sm:$0xf]
    %v47 = vld [vmem:[#allocation2 + $0x3c] sm:$0xf]
    %v48 = vld [vmem:[%s2] sm:$0x1]
    %v49 = vpack.c.bf16 %v31, %v31
    %v50 = vperm.slane %v48, 0
    %v67 = vunpack.c.l.b16 %v32
    %v68 = vunpack.c.l.b16 %v33
    %v69 = vunpack.c.l.b16 %v34
    %v70 = vunpack.c.l.b16 %v35
    %v71 = vunpack.c.l.b16 %v36
    %v72 = vunpack.c.l.b16 %v37
    %v73 = vunpack.c.l.b16 %v38
    %v74 = vunpack.c.l.b16 %v39
    %v75 = vunpack.c.l.b16 %v40
    %v76 = vunpack.c.l.b16 %v41
    %v77 = vunpack.c.l.b16 %v42
    %v78 = vunpack.c.l.b16 %v43
    %v79 = vunpack.c.l.b16 %v44
    %v80 = vunpack.c.l.b16 %v45
    %v81 = vunpack.c.l.b16 %v46
    %v82 = vunpack.c.l.b16 %v47
    %v83 = vpack.c.b16 %v68, %v67
    %v84 = vpack.c.b16 %v70, %v69
    %v85 = vpack.c.b16 %v72, %v71
    %v86 = vpack.c.b16 %v74, %v73
    %v87 = vpack.c.b16 %v76, %v75
    %v88 = vpack.c.b16 %v78, %v77
    %v89 = vpack.c.b16 %v80, %v79
    %v90 = vpack.c.b16 %v82, %v81
    %99 = vmatpush.bf16.msra.mxu0 %v90
    %100 = vmatpush.bf16.msra.mxu0 %v89
    %101 = vmatpush.bf16.msra.mxu0 %v88
    %102 = vmatpush.bf16.msra.mxu0 %v87
    %103 = vmatpush.bf16.msra.mxu0 %v86
    %104 = vmatpush.bf16.msra.mxu0 %v85
    %105 = vmatpush.bf16.msra.mxu0 %v84
    %106 = vmatpush.bf16.msra.mxu0 %v83
    %107 = vmatmul.bf16.gmra.mxu0 %v49
    %v108 = vpop.f32.mrf.mxu0
    %v109 = vadd.f32 %v50, %v108
    %v110 = vpop.f32.mrf.mxu0
    %111 = vdwg.mxu0
    %v112 = vrot.slane %v109, 4
    %v113 = vadd.f32 %v109, %v112
    %v114 = vrot.slane %v113, 2
    %v115 = vadd.f32 %v113, %v114
    %v116 = vrot.slane %v115, 1
    %v117 = vadd.f32 %v115, %v116
    %v118 = vrcp.pop 8.0
    %v119 = vmul.f32 8.0, %v118
    %v120 = vsub.f32 1.0, %v119
    %v121 = vmul.f32 %v118, %v120
    %v122 = vadd.f32 %v118, %v121
    %vm123 = vweird.f32 %v118
    %v124 = vsel %vm123, %v118, %v122
    %v125 = vmul.f32 %v117, %v124
    %v126 = vmul.f32 %v109, %v109
    %v127 = vrot.slane %v126, 4
    %v128 = vadd.f32 %v126, %v127
    %v129 = vrot.slane %v128, 2
    %v130 = vadd.f32 %v128, %v129
    %v131 = vrot.slane %v130, 1
    %v132 = vadd.f32 %v130, %v131
    %v133 = vmul.f32 %v132, %v124
    %v134 = vmul.f32 %v125, %v125
    %v135 = vsub.f32 %v133, %v134
    %v136 = vld [vmem:[%s2 + $0x5] sm:$0x1]
    %v137 = vld [vmem:[%s2 + $0x9] sm:$0x1]
    %v138 = vadd.f32 %v135, 1e-05
    %v139 = vrsqrt.pop %v138
    %v140 = vmul.f32 %v139, %v138
    %v141 = vmul.f32 %v140, %v139
    %v142 = vmul.f32 0.5, %v141
    %v143 = vsub.f32 1.5, %v142
    %v144 = vmul.f32 %v139, %v143
    %vm145 = vweird.f32 %v138
    %vm146 = vweird.f32 %v139
    %vm147 = vmor %vm145, %vm146
    %v148 = vsel %vm147, %v139, %v144
    %v149 = vmul.f32 %v136, %v148
    %v150 = vmul.f32 %v125, %v149
    %v151 = vsub.f32 %v137, %v150
    %v152 = vperm.slane %v149, 0
    %v153 = vmul.f32 %v109, %v152
    %v154 = vperm.slane %v151, 0
    %v155 = vadd.f32 %v153, %v154
    %v156 = vmax.f32 %v155, 0.0
    %s157 = scalar_lea.vmem [#allocation2], 64
    %v158 = vld [vmem:[%s157] sm:$0xf]
    %v159 = vld [vmem:[%s157 + $0x4] sm:$0xf]
    %v160 = vld [vmem:[%s157 + $0x8] sm:$0xf]
    %v161 = vld [vmem:[%s157 + $0xc] sm:$0xf]
    %v162 = vld [vmem:[%s157 + $0x10] sm:$0xf]
    %v163 = vld [vmem:[%s157 + $0x14] sm:$0xf]
    %v164 = vld [vmem:[%s157 + $0x18] sm:$0xf]
    %v165 = vld [vmem:[%s157 + $0x1c] sm:$0xf]
    %v166 = vld [vmem:[%s157 + $0x20] sm:$0xf]
    %v167 = vld [vmem:[%s157 + $0x24] sm:$0xf]
    %v168 = vld [vmem:[%s157 + $0x28] sm:$0xf]
    %v169 = vld [vmem:[%s157 + $0x2c] sm:$0xf]
    %v170 = vld [vmem:[%s157 + $0x30] sm:$0xf]
    %v171 = vld [vmem:[%s157 + $0x34] sm:$0xf]
    %v172 = vld [vmem:[%s157 + $0x38] sm:$0xf]
    %v173 = vld [vmem:[%s157 + $0x3c] sm:$0xf]
    %v174 = vld [vmem:[%s2 + $0x1] sm:$0x1]
    %v175 = vpack.c.bf16 %v156, %v156
    %v176 = vperm.slane %v174, 0
    %v193 = vunpack.c.l.b16 %v158
    %v194 = vunpack.c.l.b16 %v159
    %v195 = vunpack.c.l.b16 %v160
    %v196 = vunpack.c.l.b16 %v161
    %v197 = vunpack.c.l.b16 %v162
    %v198 = vunpack.c.l.b16 %v163
    %v199 = vunpack.c.l.b16 %v164
    %v200 = vunpack.c.l.b16 %v165
    %v201 = vunpack.c.l.b16 %v166
    %v202 = vunpack.c.l.b16 %v167
    %v203 = vunpack.c.l.b16 %v168
    %v204 = vunpack.c.l.b16 %v169
    %v205 = vunpack.c.l.b16 %v170
    %v206 = vunpack.c.l.b16 %v171
    %v207 = vunpack.c.l.b16 %v172
    %v208 = vunpack.c.l.b16 %v173
    %v209 = vpack.c.b16 %v194, %v193
    %v210 = vpack.c.b16 %v196, %v195
    %v211 = vpack.c.b16 %v198, %v197
    %v212 = vpack.c.b16 %v200, %v199
    %v213 = vpack.c.b16 %v202, %v201
    %v214 = vpack.c.b16 %v204, %v203
    %v215 = vpack.c.b16 %v206, %v205
    %v216 = vpack.c.b16 %v208, %v207
    %225 = vmatpush.bf16.msra.mxu0 %v216
    %226 = vmatpush.bf16.msra.mxu0 %v215
    %227 = vmatpush.bf16.msra.mxu0 %v214
    %228 = vmatpush.bf16.msra.mxu0 %v213
    %229 = vmatpush.bf16.msra.mxu0 %v212
    %230 = vmatpush.bf16.msra.mxu0 %v211
    %231 = vmatpush.bf16.msra.mxu0 %v210
    %232 = vmatpush.bf16.msra.mxu0 %v209
    %233 = vmatmul.bf16.gmra.mxu0 %v175
    %v234 = vpop.f32.mrf.mxu0
    %v235 = vadd.f32 %v176, %v234
    %v236 = vpop.f32.mrf.mxu0
    %237 = vdwg.mxu0
    %v238 = vrot.slane %v235, 4
    %v239 = vadd.f32 %v235, %v238
    %v240 = vrot.slane %v239, 2
    %v241 = vadd.f32 %v239, %v240
    %v242 = vrot.slane %v241, 1
    %v243 = vadd.f32 %v241, %v242
    %v244 = vmul.f32 %v243, %v124
    %v245 = vmul.f32 %v235, %v235
    %v246 = vrot.slane %v245, 4
    %v247 = vadd.f32 %v245, %v246
    %v248 = vrot.slane %v247, 2
    %v249 = vadd.f32 %v247, %v248
    %v250 = vrot.slane %v249, 1
    %v251 = vadd.f32 %v249, %v250
    %v252 = vmul.f32 %v251, %v124
    %v253 = vmul.f32 %v244, %v244
    %v254 = vsub.f32 %v252, %v253
    %v255 = vld [vmem:[%s2 + $0x6] sm:$0x1]
    %v256 = vld [vmem:[%s2 + $0xa] sm:$0x1]
    %v257 = vadd.f32 %v254, 1e-05
    %v258 = vrsqrt.pop %v257
    %v259 = vmul.f32 %v258, %v257
    %v260 = vmul.f32 %v259, %v258
    %v261 = vmul.f32 0.5, %v260
    %v262 = vsub.f32 1.5, %v261
    %v263 = vmul.f32 %v258, %v262
    %vm264 = vweird.f32 %v257
    %vm265 = vweird.f32 %v258
    %vm266 = vmor %vm264, %vm265
    %v267 = vsel %vm266, %v258, %v263
    %v268 = vmul.f32 %v255, %v267
    %v269 = vmul.f32 %v244, %v268
    %v270 = vsub.f32 %v256, %v269
    %v271 = vperm.slane %v268, 0
    %v272 = vmul.f32 %v235, %v271
    %v273 = vperm.slane %v270, 0
    %v274 = vadd.f32 %v272, %v273
    %v275 = vmax.f32 %v274, 0.0
    %s276 = scalar_lea.vmem [#allocation2], 128
    %v277 = vld [vmem:[%s276] sm:$0xf]
    %v278 = vld [vmem:[%s276 + $0x4] sm:$0xf]
    %v279 = vld [vmem:[%s276 + $0x8] sm:$0xf]
    %v280 = vld [vmem:[%s276 + $0xc] sm:$0xf]
    %v281 = vld [vmem:[%s276 + $0x10] sm:$0xf]
    %v282 = vld [vmem:[%s276 + $0x14] sm:$0xf]
    %v283 = vld [vmem:[%s276 + $0x18] sm:$0xf]
    %v284 = vld [vmem:[%s276 + $0x1c] sm:$0xf]
    %v285 = vld [vmem:[%s276 + $0x20] sm:$0xf]
    %v286 = vld [vmem:[%s276 + $0x24] sm:$0xf]
    %v287 = vld [vmem:[%s276 + $0x28] sm:$0xf]
    %v288 = vld [vmem:[%s276 + $0x2c] sm:$0xf]
    %v289 = vld [vmem:[%s276 + $0x30] sm:$0xf]
    %v290 = vld [vmem:[%s276 + $0x34] sm:$0xf]
    %v291 = vld [vmem:[%s276 + $0x38] sm:$0xf]
    %v292 = vld [vmem:[%s276 + $0x3c] sm:$0xf]
    %v293 = vld [vmem:[%s2 + $0x2] sm:$0x1]
    %v294 = vpack.c.bf16 %v275, %v275
    %v295 = vperm.slane %v293, 0
    %v312 = vunpack.c.l.b16 %v277
    %v313 = vunpack.c.l.b16 %v278
    %v314 = vunpack.c.l.b16 %v279
    %v315 = vunpack.c.l.b16 %v280
    %v316 = vunpack.c.l.b16 %v281
    %v317 = vunpack.c.l.b16 %v282
    %v318 = vunpack.c.l.b16 %v283
    %v319 = vunpack.c.l.b16 %v284
    %v320 = vunpack.c.l.b16 %v285
    %v321 = vunpack.c.l.b16 %v286
    %v322 = vunpack.c.l.b16 %v287
    %v323 = vunpack.c.l.b16 %v288
    %v324 = vunpack.c.l.b16 %v289
    %v325 = vunpack.c.l.b16 %v290
    %v326 = vunpack.c.l.b16 %v291
    %v327 = vunpack.c.l.b16 %v292
    %v328 = vpack.c.b16 %v313, %v312
    %v329 = vpack.c.b16 %v315, %v314
    %v330 = vpack.c.b16 %v317, %v316
    %v331 = vpack.c.b16 %v319, %v318
    %v332 = vpack.c.b16 %v321, %v320
    %v333 = vpack.c.b16 %v323, %v322
    %v334 = vpack.c.b16 %v325, %v324
    %v335 = vpack.c.b16 %v327, %v326
    %344 = vmatpush.bf16.msra.mxu0 %v335
    %345 = vmatpush.bf16.msra.mxu0 %v334
    %346 = vmatpush.bf16.msra.mxu0 %v333
    %347 = vmatpush.bf16.msra.mxu0 %v332
    %348 = vmatpush.bf16.msra.mxu0 %v331
    %349 = vmatpush.bf16.msra.mxu0 %v330
    %350 = vmatpush.bf16.msra.mxu0 %v329
    %351 = vmatpush.bf16.msra.mxu0 %v328
    %352 = vmatmul.bf16.gmra.mxu0 %v294
    %v353 = vpop.f32.mrf.mxu0
    %v354 = vadd.f32 %v295, %v353
    %v355 = vpop.f32.mrf.mxu0
    %356 = vdwg.mxu0
    %v357 = vrot.slane %v354, 4
    %v358 = vadd.f32 %v354, %v357
    %v359 = vrot.slane %v358, 2
    %v360 = vadd.f32 %v358, %v359
    %v361 = vrot.slane %v360, 1
    %v362 = vadd.f32 %v360, %v361
    %v363 = vmul.f32 %v362, %v124
    %v364 = vmul.f32 %v354, %v354
    %v365 = vrot.slane %v364, 4
    %v366 = vadd.f32 %v364, %v365
    %v367 = vrot.slane %v366, 2
    %v368 = vadd.f32 %v366, %v367
    %v369 = vrot.slane %v368, 1
    %v370 = vadd.f32 %v368, %v369
    %v371 = vmul.f32 %v370, %v124
    %v372 = vmul.f32 %v363, %v363
    %v373 = vsub.f32 %v371, %v372
    %v374 = vld [vmem:[%s2 + $0x7] sm:$0x1]
    %v375 = vld [vmem:[%s2 + $0xb] sm:$0x1]
    %v376 = vadd.f32 %v373, 1e-05
    %v377 = vrsqrt.pop %v376
    %v378 = vmul.f32 %v377, %v376
    %v379 = vmul.f32 %v378, %v377
    %v380 = vmul.f32 0.5, %v379
    %v381 = vsub.f32 1.5, %v380
    %v382 = vmul.f32 %v377, %v381
    %vm383 = vweird.f32 %v376
    %vm384 = vweird.f32 %v377
    %vm385 = vmor %vm383, %vm384
    %v386 = vsel %vm385, %v377, %v382
    %v387 = vmul.f32 %v374, %v386
    %v388 = vmul.f32 %v363, %v387
    %v389 = vsub.f32 %v375, %v388
    %v390 = vperm.slane %v387, 0
    %v391 = vmul.f32 %v354, %v390
    %v392 = vperm.slane %v389, 0
    %v393 = vadd.f32 %v391, %v392
    %v394 = vmax.f32 %v393, 0.0
    %s395 = scalar_lea.vmem [#allocation2], 192
    %v396 = vld [vmem:[%s395] sm:$0xf]
    %v397 = vld [vmem:[%s395 + $0x4] sm:$0xf]
    %v398 = vld [vmem:[%s395 + $0x8] sm:$0xf]
    %v399 = vld [vmem:[%s395 + $0xc] sm:$0xf]
    %v400 = vld [vmem:[%s395 + $0x10] sm:$0xf]
    %v401 = vld [vmem:[%s395 + $0x14] sm:$0xf]
    %v402 = vld [vmem:[%s395 + $0x18] sm:$0xf]
    %v403 = vld [vmem:[%s395 + $0x1c] sm:$0xf]
    %v404 = vld [vmem:[%s395 + $0x20] sm:$0xf]
    %v405 = vld [vmem:[%s395 + $0x24] sm:$0xf]
    %v406 = vld [vmem:[%s395 + $0x28] sm:$0xf]
    %v407 = vld [vmem:[%s395 + $0x2c] sm:$0xf]
    %v408 = vld [vmem:[%s395 + $0x30] sm:$0xf]
    %v409 = vld [vmem:[%s395 + $0x34] sm:$0xf]
    %v410 = vld [vmem:[%s395 + $0x38] sm:$0xf]
    %v411 = vld [vmem:[%s395 + $0x3c] sm:$0xf]
    %v412 = vld [vmem:[%s2 + $0x3] sm:$0x1]
    %v413 = vpack.c.bf16 %v394, %v394
    %v414 = vperm.slane %v412, 0
    %v431 = vunpack.c.l.b16 %v396
    %v432 = vunpack.c.l.b16 %v397
    %v433 = vunpack.c.l.b16 %v398
    %v434 = vunpack.c.l.b16 %v399
    %v435 = vunpack.c.l.b16 %v400
    %v436 = vunpack.c.l.b16 %v401
    %v437 = vunpack.c.l.b16 %v402
    %v438 = vunpack.c.l.b16 %v403
    %v439 = vunpack.c.l.b16 %v404
    %v440 = vunpack.c.l.b16 %v405
    %v441 = vunpack.c.l.b16 %v406
    %v442 = vunpack.c.l.b16 %v407
    %v443 = vunpack.c.l.b16 %v408
    %v444 = vunpack.c.l.b16 %v409
    %v445 = vunpack.c.l.b16 %v410
    %v446 = vunpack.c.l.b16 %v411
    %v447 = vpack.c.b16 %v432, %v431
    %v448 = vpack.c.b16 %v434, %v433
    %v449 = vpack.c.b16 %v436, %v435
    %v450 = vpack.c.b16 %v438, %v437
    %v451 = vpack.c.b16 %v440, %v439
    %v452 = vpack.c.b16 %v442, %v441
    %v453 = vpack.c.b16 %v444, %v443
    %v454 = vpack.c.b16 %v446, %v445
    %463 = vmatpush.bf16.msra.mxu0 %v454
    %464 = vmatpush.bf16.msra.mxu0 %v453
    %465 = vmatpush.bf16.msra.mxu0 %v452
    %466 = vmatpush.bf16.msra.mxu0 %v451
    %467 = vmatpush.bf16.msra.mxu0 %v450
    %468 = vmatpush.bf16.msra.mxu0 %v449
    %469 = vmatpush.bf16.msra.mxu0 %v448
    %470 = vmatpush.bf16.msra.mxu0 %v447
    %471 = vmatmul.bf16.gmra.mxu0 %v413
    %v472 = vpop.f32.mrf.mxu0
    %v473 = vadd.f32 %v414, %v472
    %v474 = vpop.f32.mrf.mxu0
    %475 = vdwg.mxu0
    %v476 = vrot.slane %v473, 4
    %v477 = vadd.f32 %v473, %v476
    %v478 = vrot.slane %v477, 2
    %v479 = vadd.f32 %v477, %v478
    %v480 = vrot.slane %v479, 1
    %v481 = vadd.f32 %v479, %v480
    %v482 = vmul.f32 %v481, %v124
    %v483 = vmul.f32 %v473, %v473
    %v484 = vrot.slane %v483, 4
    %v485 = vadd.f32 %v483, %v484
    %v486 = vrot.slane %v485, 2
    %v487 = vadd.f32 %v485, %v486
    %v488 = vrot.slane %v487, 1
    %v489 = vadd.f32 %v487, %v488
    %v490 = vmul.f32 %v489, %v124
    %v491 = vmul.f32 %v482, %v482
    %v492 = vsub.f32 %v490, %v491
    %v493 = vld [vmem:[%s2 + $0x8] sm:$0x1]
    %v494 = vld [vmem:[%s2 + $0xc] sm:$0x1]
    %v495 = vadd.f32 %v492, 1e-05
    %v496 = vrsqrt.pop %v495
    %v497 = vmul.f32 %v496, %v495
    %v498 = vmul.f32 %v497, %v496
    %v499 = vmul.f32 0.5, %v498
    %v500 = vsub.f32 1.5, %v499
    %v501 = vmul.f32 %v496, %v500
    %vm502 = vweird.f32 %v495
    %vm503 = vweird.f32 %v496
    %vm504 = vmor %vm502, %vm503
    %v505 = vsel %vm504, %v496, %v501
    %v506 = vmul.f32 %v493, %v505
    %v507 = vmul.f32 %v482, %v506
    %v508 = vsub.f32 %v494, %v507
    %v509 = vperm.slane %v506, 0
    %v510 = vmul.f32 %v473, %v509
    %v511 = vperm.slane %v508, 0
    %v512 = vadd.f32 %v510, %v511
    %v513 = vmax.f32 %v512, 0.0
    %s514 = scalar_lea.vmem [#allocation2], 256
    %v515 = vld [vmem:[%s514] sm:$0xf]
    %v516 = vld [vmem:[%s514 + $0x4] sm:$0xf]
    %v517 = vld [vmem:[%s514 + $0x8] sm:$0xf]
    %v518 = vld [vmem:[%s514 + $0xc] sm:$0xf]
    %v519 = vld [vmem:[%s514 + $0x10] sm:$0xf]
    %v520 = vld [vmem:[%s514 + $0x14] sm:$0xf]
    %v521 = vld [vmem:[%s514 + $0x18] sm:$0xf]
    %v522 = vld [vmem:[%s514 + $0x1c] sm:$0xf]
    %v523 = vld [vmem:[%s514 + $0x20] sm:$0xf]
    %v524 = vld [vmem:[%s514 + $0x24] sm:$0xf]
    %v525 = vld [vmem:[%s514 + $0x28] sm:$0xf]
    %v526 = vld [vmem:[%s514 + $0x2c] sm:$0xf]
    %v527 = vld [vmem:[%s514 + $0x30] sm:$0xf]
    %v528 = vld [vmem:[%s514 + $0x34] sm:$0xf]
    %v529 = vld [vmem:[%s514 + $0x38] sm:$0xf]
    %v530 = vld [vmem:[%s514 + $0x3c] sm:$0xf]
    %v531 = vld [vmem:[%s2 + $0x4] sm:$0x1]
    %v532 = vpack.c.bf16 %v513, %v513
    %v533 = vperm.slane %v531, 0
    %v550 = vunpack.c.l.b16 %v515
    %v551 = vunpack.c.l.b16 %v516
    %v552 = vunpack.c.l.b16 %v517
    %v553 = vunpack.c.l.b16 %v518
    %v554 = vunpack.c.l.b16 %v519
    %v555 = vunpack.c.l.b16 %v520
    %v556 = vunpack.c.l.b16 %v521
    %v557 = vunpack.c.l.b16 %v522
    %v558 = vunpack.c.l.b16 %v523
    %v559 = vunpack.c.l.b16 %v524
    %v560 = vunpack.c.l.b16 %v525
    %v561 = vunpack.c.l.b16 %v526
    %v562 = vunpack.c.l.b16 %v527
    %v563 = vunpack.c.l.b16 %v528
    %v564 = vunpack.c.l.b16 %v529
    %v565 = vunpack.c.l.b16 %v530
    %v566 = vpack.c.b16 %v551, %v550
    %v567 = vpack.c.b16 %v553, %v552
    %v568 = vpack.c.b16 %v555, %v554
    %v569 = vpack.c.b16 %v557, %v556
    %v570 = vpack.c.b16 %v559, %v558
    %v571 = vpack.c.b16 %v561, %v560
    %v572 = vpack.c.b16 %v563, %v562
    %v573 = vpack.c.b16 %v565, %v564
    %582 = vmatpush.bf16.msra.mxu0 %v573
    %583 = vmatpush.bf16.msra.mxu0 %v572
    %584 = vmatpush.bf16.msra.mxu0 %v571
    %585 = vmatpush.bf16.msra.mxu0 %v570
    %586 = vmatpush.bf16.msra.mxu0 %v569
    %587 = vmatpush.bf16.msra.mxu0 %v568
    %588 = vmatpush.bf16.msra.mxu0 %v567
    %589 = vmatpush.bf16.msra.mxu0 %v566
    %590 = vmatmul.bf16.gmra.mxu0 %v532
    %v591 = vpop.f32.mrf.mxu0
    %v592 = vadd.f32 %v533, %v591
    %v593 = vpop.f32.mrf.mxu0
    %594 = vdwg.mxu0
    %595 = vst [vmem:[#allocation5] sm:$0xff] %v592
    // Predicated region
    $region18: #{decoder_forward.1} parent=1 // pred_check
      _
    $region19: #{decoder_forward.1} parent=1 // pred_check_branch
      %597 = sbr.rel (0) target = $region21
    $region20: #{decoder_forward.1} parent=1 // pred_region
      %599 = vsyncadd [#allocation4], 0
      %s601 = sshll.u32 [#allocation5], 4
      %s602 = int_to_ptr.vmem [resolvable:$true] %s601
      %s603 = sshll.u32 %s3, 4
      %s604 = int_to_ptr.hbm [resolvable:$true] %s603
      %606 = dma.vmem_to_hbm [thread:$0]  %s602, 128, %s604, [#allocation4]
    $region21: #{decoder_forward.1} parent=1 // pred_fallthru
      _
    // Predicated region
    $region22: #{decoder_forward.1} parent=1 // pred_check
      _
    $region23: #{decoder_forward.1} parent=1 // pred_check_branch
      %608 = sbr.rel (0) target = $region25
    $region24: #{decoder_forward.1} parent=1 // pred_region
      %610 = dma.done [#allocation4], 128
    $region25: #{decoder_forward.1} parent=1 // pred_fallthru
      _
    %611 = vsyncpa [#allocation3], 1
    %612 = vsyncpa [#allocation4], 1

</llo_original>
